<compile_context>
chip_gen: v7x
topology: tpu7x:2x2x1
jax: 0.10.0
libtpu: 0.0.40
codegen_flags: <defaults>
</compile_context>

<pallas_src>
import functools
from typing import NamedTuple

import jax
import jax.numpy as jnp
from jax.experimental import pallas as pl
from jax.experimental.pallas import tpu as pltpu


def _round_up(x, m):
    return (x + m - 1) // m * m


class TileCfg(NamedTuple):
    tn: int
    tk: int
    n_pad: int
    d_pad: int
    c_pad: int
    w_resident: bool


def _pick_tn(n):
    """Row-tile size: minimize row padding (kernel is HBM-bound on x) and prefer
    an even number of row tiles (v7x shards the 'parallel' axis over 2 TCs)."""
    if n <= 128:
        return _round_up(n, 8)
    best_score, best_tn = None, 128
    for tn in (512, 384, 256, 192, 128):
        n_pad = _round_up(n, tn)
        tiles = n_pad // tn
        waste = n_pad - n
        uneven = 0 if (tiles % 2 == 0 or tiles == 1) else 1
        score = (waste, uneven, -tn)
        if best_score is None or score < best_score:
            best_score, best_tn = score, tn
    return best_tn


def plan_tiles(n, d, c):
    """Static tile plan from shapes (runs at trace time; all Python ints)."""
    c_pad = _round_up(max(c, 128), 128)
    d_pad = _round_up(d, 128)
    tn = _pick_tn(n)
    n_pad = _round_up(n, tn)
    # Keep the weight resident in VMEM (fetched once) when its double-buffered
    # copy fits a conservative budget; otherwise stream (TK, C_PAD) tiles per k.
    # TODO(synk): pipeline_mode=pl.Buffered(1) on the resident weight would halve
    # its VMEM footprint (the constant index_map means it is only DMA'd once).
    w_resident = (2 * d_pad * c_pad * 2) <= (24 << 20)
    per_tk_bytes = 2 * tn * 2 + (0 if w_resident else 2 * c_pad * 2)
    tk_cap = max(128, min((16 << 20) // per_tk_bytes, d_pad)) // 128 * 128
    tk = 128
    t = 256
    while t <= tk_cap:
        if d_pad % t == 0:  # divisor of D_pad -> zero extra K padding
            tk = t
        t += 128
    return TileCfg(tn=tn, tk=tk, n_pad=n_pad, d_pad=d_pad, c_pad=c_pad,
                   w_resident=w_resident)


# ---------------------------------------------------------------------------
# Pallas kernel: K-tiled linear layer + fused masked log_softmax epilogue
# ---------------------------------------------------------------------------
def _make_kernel(num_classes, tk, num_k, w_resident):
    def kernel(x_ref, w_ref, b_ref, o_ref):
        k = pl.program_id(1)

        @pl.when(k == 0)
        def _init():
            o_ref[...] = jnp.zeros_like(o_ref)

        if w_resident and num_k > 1:
            # Full weight is grid-resident in VMEM; slice the rows of this K step.
            wk = w_ref[pl.ds(pl.multiple_of(k * tk, 128), tk), :]
        else:
            wk = w_ref[...]

        # (TN, TK) bf16 @ (TK, C_PAD) bf16 -> f32, accumulated directly in the
        # f32 output block (its block index is constant over k -> resident).
        o_ref[...] += jnp.dot(x_ref[...], wk, preferred_element_type=jnp.float32)

        @pl.when(k == num_k - 1)
        def _finalize():
            logits = o_ref[...] + b_ref[...]                     # (TN, C_PAD) f32
            # Mask padded class lanes so they never influence max / log-sum-exp.
            col = jax.lax.broadcasted_iota(jnp.int32, logits.shape, 1)
            logits = jnp.where(col < num_classes, logits, jnp.float32(-1e30))
            m = jnp.max(logits, axis=-1, keepdims=True)
            z = logits - m
            lse = jnp.log(jnp.sum(jnp.exp(z), axis=-1, keepdims=True))
            o_ref[...] = z - lse

    return kernel


def linear_log_softmax_padded(x_p, w_p, b_p, num_classes, cfg):
    """log_softmax(x_p @ w_p + b_p) over the first `num_classes` lanes.

    x_p : (N_pad, D_pad) bf16   zero-padded standardized node embeddings
    w_p : (D_pad, C_PAD) bf16   zero-padded lin1 weight (stored as x @ W)
    b_p : (1, C_PAD)     f32    zero-padded lin1 bias
    Returns the full (N_pad, C_PAD) f32 array; caller slices the valid part.
    """
    tn, tk = cfg.tn, cfg.tk
    n_pad, d_pad, c_pad = cfg.n_pad, cfg.d_pad, cfg.c_pad
    assert x_p.shape == (n_pad, d_pad)
    assert w_p.shape == (d_pad, c_pad)
    assert b_p.shape == (1, c_pad)

    num_k = d_pad // tk
    grid = (n_pad // tn, num_k)

    if cfg.w_resident:
        # Constant block index -> DMA'd into VMEM exactly once, stays resident.
        w_spec = pl.BlockSpec((d_pad, c_pad), lambda i, k: (0, 0))
        w_bytes = 2 * d_pad * c_pad * 2
    else:
        w_spec = pl.BlockSpec((tk, c_pad), lambda i, k: (k, 0))
        w_bytes = 2 * tk * c_pad * 2

    vmem_bytes = (2 * tn * tk * 2          # double-buffered x tiles (bf16)
                  + w_bytes                # weight buffers (bf16)
                  + 2 * tn * c_pad * 4     # output blocks (f32)
                  + 2 * c_pad * 4)         # bias
    vmem_limit = int(min(max(vmem_bytes + (4 << 20), 32 << 20), 64 << 20))

    return pl.pallas_call(
        _make_kernel(num_classes, tk, num_k, cfg.w_resident),
        out_shape=jax.ShapeDtypeStruct((n_pad, c_pad), jnp.float32),
        grid_spec=pltpu.PrefetchScalarGridSpec(
            num_scalar_prefetch=0,
            grid=grid,
            in_specs=[
                pl.BlockSpec((tn, tk), lambda i, k: (i, k)),   # x tile
                w_spec,                                        # weight
                pl.BlockSpec((1, c_pad), lambda i, k: (0, 0)), # bias (resident)
            ],
            out_specs=pl.BlockSpec((tn, c_pad), lambda i, k: (i, 0)),
        ),
        compiler_params=pltpu.CompilerParams(
            dimension_semantics=("parallel", "arbitrary"),
            vmem_limit_bytes=vmem_limit,
        ),
    )(x_p, w_p, b_p)


# ---------------------------------------------------------------------------
# Parameter preprocessing (constant across forward calls -> hoisted out)
# ---------------------------------------------------------------------------
def prepare_linear_params(w, b):
    """Pad/cast nn.Linear parameters once: (D,C)->(D_pad,128) bf16, (C,)->(1,128) f32."""
    d, c = w.shape
    d_pad = _round_up(d, 128)
    c_pad = _round_up(max(c, 128), 128)
    w_p = jnp.zeros((d_pad, c_pad), jnp.bfloat16).at[:d, :c].set(w.astype(jnp.bfloat16))
    b_p = jnp.zeros((1, c_pad), jnp.float32).at[0, :c].set(b.astype(jnp.float32))
    return w_p, b_p


# ---------------------------------------------------------------------------
# Feature sampling + embedding construction (JAX glue around the kernel)
# ---------------------------------------------------------------------------
def sample_keep_mask(key, x, num_sampled):
    """Per-node weighted feature sampling without replacement.

    Matches the distribution of the original per-node
    np.random.choice(F, size=num_sampled, replace=False, p=...) (0.5 probability
    mass split over present / absent features) via the Gumbel-top-k trick.
    """
    n, f = x.shape
    present = x != 0
    n_pres = present.sum(axis=1, keepdims=True)
    n_abs = f - n_pres
    prob = jnp.where(present,
                     0.5 / jnp.maximum(n_pres, 1),
                     0.5 / jnp.maximum(n_abs, 1)).astype(jnp.float32)
    scores = jnp.log(prob) + jax.random.gumbel(key, (n, f), dtype=jnp.float32)
    kth = jax.lax.top_k(scores, num_sampled)[0][:, -1:]
    return scores >= kth   # (N, F) bool: sampled feature slots keep their vector


def build_node_embedding_bf16(x, feat_emb, mask_token, keep, n_pad, d_pad):
    """Standardized flattened per-node embedding, emitted directly as a
    zero-padded (n_pad, d_pad) bf16 array (no (N, D) f32 intermediate).

    Column layout per feature slot f: [feat_emb[f, 0:E-1], value] where
    value = x[:, f]; non-sampled slots are replaced by mask_token.  The
    StandardScaler (population std) mean/std per column are computed
    analytically from small arrays since each column is a two-point /
    masked-value mixture over nodes.
    """
    n, f = x.shape
    em1 = feat_emb.shape[1]
    e = em1 + 1
    xf = x.astype(jnp.float32)
    keep_f = keep.astype(jnp.float32)
    fe = feat_emb.astype(jnp.float32)          # (F, E-1)
    mt = mask_token.astype(jnp.float32)        # (E,)

    p = keep_f.mean(axis=0)                    # (F,) fraction of nodes keeping slot f
    s1 = (keep_f * xf).mean(axis=0)            # (F,) E[keep * x]
    s2 = (keep_f * xf * xf).mean(axis=0)       # (F,) E[keep * x^2]

    # columns e < E-1: value is feat_emb[f,e] (kept) or mask_token[e] (masked)
    mean_fe = p[:, None] * fe + (1.0 - p[:, None]) * mt[None, :em1]
    m2_fe = p[:, None] * fe**2 + (1.0 - p[:, None]) * mt[None, :em1] ** 2
    # column e = E-1: value is x[n,f] (kept) or mask_token[-1] (masked)
    mean_v = s1 + (1.0 - p) * mt[em1]
    m2_v = s2 + (1.0 - p) * mt[em1] ** 2

    mean = jnp.concatenate([mean_fe, mean_v[:, None]], axis=1)        # (F, E)
    var = jnp.concatenate([m2_fe, m2_v[:, None]], axis=1) - mean**2
    std = jnp.sqrt(jnp.maximum(var, 0.0))
    # StandardScaler: zero-variance columns are left unscaled -> become 0.
    inv = jnp.where(std < 1e-6, 1.0, 1.0 / jnp.maximum(std, 1e-30))

    base = jnp.concatenate(
        [jnp.broadcast_to(fe[None], (n, f, em1)), xf[:, :, None]], axis=-1)
    vec = jnp.where(keep[:, :, None], base, mt[None, None, :])
    flat = ((vec - mean[None]) * inv[None]).reshape(n, f * e).astype(jnp.bfloat16)

    out = jnp.zeros((n_pad, d_pad), jnp.bfloat16)
    return out.at[:n, :f * e].set(flat)


@functools.partial(jax.jit, static_argnames=("num_sampled", "num_classes"))
def model_forward(x, feat_emb, mask_token, w_p, b_p, sample_key, *,
                  num_sampled, num_classes):
    """LinearLayerModel.forward: embed+mask+standardize, lin1, log_softmax.

    (dropout_adj on edge_index and drop1(x) do not affect the returned tensor.)
    """
    n, f = x.shape
    e = mask_token.shape[0]
    d = f * e
    cfg = plan_tiles(n, d, num_classes)
    keep = sample_keep_mask(sample_key, x, num_sampled)
    x_p = build_node_embedding_bf16(x, feat_emb, mask_token, keep,
                                    cfg.n_pad, cfg.d_pad)
    out = linear_log_softmax_padded(x_p, w_p, b_p, num_classes, cfg)
    return out[:n, :num_classes], keep


# ---------------------------------------------------------------------------
# Pure-JAX reference (straightforward f32 implementation) for the sanity check
# ---------------------------------------------------------------------------
def reference_log_probs(x, feat_emb, mask_token, keep, w, b):
    n, f = x.shape
    e = feat_emb.shape[1] + 1
    base = jnp.concatenate(
        [jnp.broadcast_to(feat_emb[None], (n, f, e - 1)), x[:, :, None]], axis=-1)
    vec = jnp.where(keep[:, :, None], base, mask_token[None, None, :])
    flat = vec.reshape(n, f * e)
    mean = flat.mean(axis=0, keepdims=True)
    std = flat.std(axis=0, keepdims=True)
    flat = (flat - mean) / jnp.where(std < 1e-6, 1.0, std)
    return jax.nn.log_softmax(flat @ w + b, axis=-1)


# ---------------------------------------------------------------------------
# Main: deterministic small-shape example
# ---------------------------------------------------------------------------
if __name__ == "__main__":
    # Small stand-in for Cora: N nodes, F node features, emb_dim E, C classes.
    N, F, E, C = 12, 16, 8, 7
    NUM_SAMPLED = 4                        # stand-in for num_sampled_vectors=40
    D = F * E                              # lin1 in_features

    key = jax.random.PRNGKey(0)
    k_x, k_fe, k_mask, k_w, k_b, k_samp = jax.random.split(key, 6)

    # Raw (sparse-ish) node features, like Cora's bag-of-words.
    x = (jax.random.uniform(k_x, (N, F)) > 0.5).astype(jnp.float32)

    # TODO(synk): original uses sklearn PCA(n_components=E-1) on x.T for the
    # per-feature embedding; replaced by a fixed deterministic matrix here.
    feat_emb = jax.random.normal(k_fe, (F, E - 1), dtype=jnp.float32) * 0.1
    # nn.init.normal_(mask_token, std=0.02) -> shape (E,)
    mask_token = jax.random.normal(k_mask, (E,), dtype=jnp.float32) * 0.02
    # nn.Linear(D, C): stored as (D, C) so the kernel computes x @ W
    w = jax.random.normal(k_w, (D, C), dtype=jnp.float32) * (1.0 / jnp.sqrt(D))
    b = jax.random.normal(k_b, (C,), dtype=jnp.float32) * 0.01

    # Constant parameters: pad/cast once, outside the per-call path.
    w_p, b_p = prepare_linear_params(w, b)

    out, keep = model_forward(x, feat_emb, mask_token, w_p, b_p, k_samp,
                              num_sampled=NUM_SAMPLED, num_classes=C)
    out = jax.block_until_ready(out)
    assert out.shape == (N, C)

    # sanity 1: log_softmax rows must sum (in prob space) to ~1
    row_sums = jnp.exp(out).sum(axis=1)
    assert bool(jnp.all(jnp.abs(row_sums - 1.0) < 1e-4))

    # sanity 2: matches pure-f32 JAX reference within bf16 input rounding
    ref = reference_log_probs(x, feat_emb, mask_token, keep, w, b)
    assert bool(jnp.all(jnp.abs(out - ref) < 1e-1))

    print("KERNEL_OK")
</pallas_src>

<mosaic_0001>
module attributes {stable_mosaic.version = 11 : i64} {
  func.func @kernel(%arg0: i32, %arg1: i32, %arg2: memref<16x128xbf16, #tpu.memory_space<vmem>>, %arg3: memref<128x128xbf16, #tpu.memory_space<vmem>>, %arg4: memref<1x128xf32, #tpu.memory_space<vmem>>, %arg5: memref<16x128xf32, #tpu.memory_space<vmem>>) attributes {dimension_semantics = [#tpu.dimension_semantics<parallel>, #tpu.dimension_semantics<arbitrary>], iteration_bounds = array<i64: 1, 1>, scalar_prefetch = 0 : i64, scratch_operands = 0 : i64, tpu.core_type = #tpu.core_type<tc>, window_params = [{transform_indices = @transform_0, window_bounds = array<i64: 16, 128>}, {pipeline_mode = #tpu.pipeline_mode<synchronous>, transform_indices = @transform_1, window_bounds = array<i64: 128, 128>}, {pipeline_mode = #tpu.pipeline_mode<synchronous>, transform_indices = @transform_2, window_bounds = array<i64: 1, 128>}, {transform_indices = @transform_3, window_bounds = array<i64: 16, 128>}]} {
    %c0_i32 = arith.constant 0 : i32
    %0 = arith.cmpi eq, %arg1, %c0_i32 : i32
    %1 = arith.extui %0 : i1 to i32
    %c0_i32_0 = arith.constant 0 : i32
    %2 = arith.cmpi ne, %1, %c0_i32_0 : i32
    scf.if %2 {
      %cst_10 = arith.constant 0.000000e+00 : f32
      %12 = vector.broadcast %cst_10 : f32 to vector<16x128xf32>
      %c0_11 = arith.constant 0 : index
      %c0_12 = arith.constant 0 : index
      %13 = vector.load %arg5[%c0_11, %c0_12] : memref<16x128xf32, #tpu.memory_space<vmem>>, vector<16x128xf32>
      tpu.vector_store %arg5[%c0_11, %c0_12], %12 {strides = array<i32>} : memref<16x128xf32, #tpu.memory_space<vmem>>, vector<16x128xf32>,
    } else {
    }
    %c0 = arith.constant 0 : index
    %c0_1 = arith.constant 0 : index
    %3 = vector.load %arg3[%c0, %c0_1] : memref<128x128xbf16, #tpu.memory_space<vmem>>, vector<128x128xbf16>
    %c0_2 = arith.constant 0 : index
    %c0_3 = arith.constant 0 : index
    %4 = vector.load %arg5[%c0_2, %c0_3] : memref<16x128xf32, #tpu.memory_space<vmem>>, vector<16x128xf32>
    %c0_4 = arith.constant 0 : index
    %c0_5 = arith.constant 0 : index
    %5 = vector.load %arg2[%c0_4, %c0_5] : memref<16x128xbf16, #tpu.memory_space<vmem>>, vector<16x128xbf16>
    %cst = arith.constant dense<0.000000e+00> : vector<16x128xf32>
    %6 = tpu.matmul %5, %3, %cst {dimension_numbers = #tpu.dot_dimension_numbers<[1], [0], [0], [1], [0, 0, 1, 1], [], []>} : vector<16x128xbf16>, vector<128x128xbf16>, vector<16x128xf32> -> vector<16x128xf32>
    %7 = arith.addf %4, %6 : vector<16x128xf32>
    %c0_6 = arith.constant 0 : index
    %c0_7 = arith.constant 0 : index
    %8 = vector.load %arg5[%c0_6, %c0_7] : memref<16x128xf32, #tpu.memory_space<vmem>>, vector<16x128xf32>
    tpu.vector_store %arg5[%c0_6, %c0_7], %7 {strides = array<i32>} : memref<16x128xf32, #tpu.memory_space<vmem>>, vector<16x128xf32>,
    %c0_i32_8 = arith.constant 0 : i32
    %9 = arith.cmpi eq, %arg1, %c0_i32_8 : i32
    %10 = arith.extui %9 : i1 to i32
    %c0_i32_9 = arith.constant 0 : i32
    %11 = arith.cmpi ne, %10, %c0_i32_9 : i32
    scf.if %11 {
      %c0_10 = arith.constant 0 : index
      %c0_11 = arith.constant 0 : index
      %12 = vector.load %arg5[%c0_10, %c0_11] : memref<16x128xf32, #tpu.memory_space<vmem>>, vector<16x128xf32>
      %c0_12 = arith.constant 0 : index
      %c0_13 = arith.constant 0 : index
      %13 = vector.load %arg4[%c0_12, %c0_13] : memref<1x128xf32, #tpu.memory_space<vmem>>, vector<1x128xf32>
      %14 = vector.broadcast %13 : vector<1x128xf32> to vector<16x128xf32>
      %15 = arith.addf %12, %14 : vector<16x128xf32>
      %16 = tpu.iota {dimensions = array<i32: 1>} : vector<16x128xi32>
      %c7_i32 = arith.constant 7 : i32
      %17 = vector.broadcast %c7_i32 : i32 to vector<16x128xi32>
      %18 = arith.cmpi slt, %16, %17 : vector<16x128xi32>
      %cst_14 = arith.constant -1.000000e+30 : f32
      %19 = vector.broadcast %cst_14 : f32 to vector<16x128xf32>
      %20 = arith.select %18, %15, %19 : vector<16x128xi1>, vector<16x128xf32>
      %cst_15 = arith.constant dense<0xFF800000> : vector<16xf32>
      %21 = vector.multi_reduction <maximumf>, %20, %cst_15 [1] : vector<16x128xf32> to vector<16xf32>
      %22 = vector.shape_cast %21 : vector<16xf32> to vector<16x1xf32>
      %23 = vector.broadcast %22 : vector<16x1xf32> to vector<16x128xf32>
      %24 = arith.subf %20, %23 : vector<16x128xf32>
      %25 = math.exp %24 : vector<16x128xf32>
      %cst_16 = arith.constant dense<0.000000e+00> : vector<16xf32>
      %26 = vector.multi_reduction <add>, %25, %cst_16 [1] : vector<16x128xf32> to vector<16xf32>
      %27 = vector.shape_cast %26 : vector<16xf32> to vector<16x1xf32>
      %28 = math.log %27 : vector<16x1xf32>
      %29 = vector.broadcast %28 : vector<16x1xf32> to vector<16x128xf32>
      %30 = arith.subf %24, %29 : vector<16x128xf32>
      %c0_17 = arith.constant 0 : index
      %c0_18 = arith.constant 0 : index
      %31 = vector.load %arg5[%c0_17, %c0_18] : memref<16x128xf32, #tpu.memory_space<vmem>>, vector<16x128xf32>
      tpu.vector_store %arg5[%c0_17, %c0_18], %30 {strides = array<i32>} : memref<16x128xf32, #tpu.memory_space<vmem>>, vector<16x128xf32>,
    } else {
    }
    return
  }
  func.func @transform_0(%arg0: i32, %arg1: i32) -> (i32, i32) {
    %c0_i32 = arith.constant 0 : i32
    return %arg0, %arg1 : i32, i32
  }
  func.func @transform_1(%arg0: i32, %arg1: i32) -> (i32, i32) {
    %c0_i32 = arith.constant 0 : i32
    %c0_i32_0 = arith.constant 0 : i32
    %c0_i32_1 = arith.constant 0 : i32
    return %c0_i32, %c0_i32_0 : i32, i32
  }
  func.func @transform_2(%arg0: i32, %arg1: i32) -> (i32, i32) {
    %c0_i32 = arith.constant 0 : i32
    %c0_i32_0 = arith.constant 0 : i32
    %c0_i32_1 = arith.constant 0 : i32
    return %c0_i32, %c0_i32_0 : i32, i32
  }
  func.func @transform_3(%arg0: i32, %arg1: i32) -> (i32, i32) {
    %c0_i32 = arith.constant 0 : i32
    %c0_i32_0 = arith.constant 0 : i32
    return %arg0, %c0_i32 : i32, i32
  }
}

</mosaic_0001>

<llo_original>
// kernel: model_forward.1
$region0: #{model_forward.1}
  #allocation0 [shape = 'u32[]', space=smem, size = 0x4, offset = 0x4, fixed_abs, tag = 'smem constant byte address 0x4 - core index']
  #allocation1 [shape = 'u32[144,128]{1,0:T(1,128)}', space=vmem, size = 0x12000, scoped, tag = 'internal scratch']
  %s0 = inlined_call_operand.vmem [shape: bf16[16,128], index: 0, kind: input, shape index: {}]
  %s1 = inlined_call_operand.vmem [shape: bf16[128,128], index: 1, kind: input, shape index: {}]
  %s2 = inlined_call_operand.vmem [shape: f32[1,128], index: 2, kind: input, shape index: {}]
  %s3 = inlined_call_operand.vmem [shape: f32[16,128], index: 3, kind: output, shape index: {}]
  %s4 = sld [smem:[#allocation0]]
  $region30: #{model_forward.1} parent=0
    _
  %s6 = ssub.s32 1, %s4
  %s7 = scalar_select 0, %s6, %s4
  // Predicated region
  $region2: #{model_forward.1} parent=0 // pred_check
    _
  $region3: #{model_forward.1} parent=0 // pred_check_branch
    %9 = sbr.rel (0) target = $region5
  $region4: #{model_forward.1} parent=0 // pred_region
    _
  $region5: #{model_forward.1} parent=0 // pred_fallthru
    _
  // Predicated region
  $region6: #{model_forward.1} parent=0 // pred_check
    _
  $region7: #{model_forward.1} parent=0 // pred_check_branch
    %11 = sbr.rel (0) target = $region9
  $region8: #{model_forward.1} parent=0 // pred_region
    _
  $region9: #{model_forward.1} parent=0 // pred_fallthru
    _
  // Predicated region
  $region10: #{model_forward.1} parent=0 // pred_check
    _
  $region11: #{model_forward.1} parent=0 // pred_check_branch
    %13 = sbr.rel (0) target = $region13
  $region12: #{model_forward.1} parent=0 // pred_region
    _
  $region13: #{model_forward.1} parent=0 // pred_fallthru
    _
  %p15 = scmp.eq.s32.totalorder 0, 0
  // Predicated region
  $region14: #{model_forward.1} parent=0 // pred_check
    %p16 = pneg %p15
  $region15: #{model_forward.1} parent=0 // pred_check_branch
    %18 = sbr.rel (%p16) target = $region17
  $region16: #{model_forward.1} parent=0 // pred_region
    %19 = vst [vmem:[%s3] sm:$0xff] 0.0
    %20 = vst [vmem:[%s3 + $0x8] sm:$0xff] 0.0
  $region17: #{model_forward.1} parent=0 // pred_fallthru
    _
  %v21 = vld [vmem:[%s1] sm:$0xf]
  %v22 = vld [vmem:[%s1 + $0x4] sm:$0xf]
  %v23 = vld [vmem:[%s1 + $0x8] sm:$0xf]
  %v24 = vld [vmem:[%s1 + $0xc] sm:$0xf]
  %v25 = vld [vmem:[%s1 + $0x10] sm:$0xf]
  %v26 = vld [vmem:[%s1 + $0x14] sm:$0xf]
  %v27 = vld [vmem:[%s1 + $0x18] sm:$0xf]
  %v28 = vld [vmem:[%s1 + $0x1c] sm:$0xf]
  %v29 = vld [vmem:[%s1 + $0x20] sm:$0xf]
  %v30 = vld [vmem:[%s1 + $0x24] sm:$0xf]
  %v31 = vld [vmem:[%s1 + $0x28] sm:$0xf]
  %v32 = vld [vmem:[%s1 + $0x2c] sm:$0xf]
  %v33 = vld [vmem:[%s1 + $0x30] sm:$0xf]
  %v34 = vld [vmem:[%s1 + $0x34] sm:$0xf]
  %v35 = vld [vmem:[%s1 + $0x38] sm:$0xf]
  %v36 = vld [vmem:[%s1 + $0x3c] sm:$0xf]
  %v37 = vld [vmem:[%s3] sm:$0xff]
  %v38 = vld [vmem:[%s3 + $0x8] sm:$0xff]
  %v39 = vld [vmem:[%s0] sm:$0xf]
  %v40 = vld [vmem:[%s0 + $0x4] sm:$0xf]
  %v43 = vunpack.c.l.b16 %v39
  %v44 = vunpack.c.l.b16 %v40
  %v45 = vpack.c.b16 %v44, %v43
  %v63 = vunpack.c.l.b16 %v21
  %v64 = vunpack.c.l.b16 %v22
  %v65 = vunpack.c.l.b16 %v23
  %v66 = vunpack.c.l.b16 %v24
  %v67 = vunpack.c.l.b16 %v25
  %v68 = vunpack.c.l.b16 %v26
  %v69 = vunpack.c.l.b16 %v27
  %v70 = vunpack.c.l.b16 %v28
  %v71 = vunpack.c.l.b16 %v29
  %v72 = vunpack.c.l.b16 %v30
  %v73 = vunpack.c.l.b16 %v31
  %v74 = vunpack.c.l.b16 %v32
  %v75 = vunpack.c.l.b16 %v33
  %v76 = vunpack.c.l.b16 %v34
  %v77 = vunpack.c.l.b16 %v35
  %v78 = vunpack.c.l.b16 %v36
  %v79 = vpack.c.b16 %v64, %v63
  %v80 = vpack.c.b16 %v66, %v65
  %v81 = vpack.c.b16 %v68, %v67
  %v82 = vpack.c.b16 %v70, %v69
  %v83 = vpack.c.b16 %v72, %v71
  %v84 = vpack.c.b16 %v74, %v73
  %v85 = vpack.c.b16 %v76, %v75
  %v86 = vpack.c.b16 %v78, %v77
  %95 = vmatprep.subr.bf16.mxu0 0
  %96 = vmatpush1.bf16.msra.mxu0 %v79
  %97 = vmatprep.subr.bf16.mxu0 0
  %98 = vmatpush1.bf16.msra.mxu0 %v80
  %99 = vmatprep.subr.bf16.mxu0 0
  %100 = vmatpush1.bf16.msra.mxu0 %v81
  %101 = vmatprep.subr.bf16.mxu0 0
  %102 = vmatpush1.bf16.msra.mxu0 %v82
  %103 = vmatprep.subr.bf16.mxu0 0
  %104 = vmatpush1.bf16.msra.mxu0 %v83
  %105 = vmatprep.subr.bf16.mxu0 0
  %106 = vmatpush1.bf16.msra.mxu0 %v84
  %107 = vmatprep.subr.bf16.mxu0 0
  %108 = vmatpush1.bf16.msra.mxu0 %v85
  %109 = vmatprep.subr.bf16.mxu0 0
  %110 = vmatpush1.bf16.msra.mxu0 %v86
  %111 = vmatprep.subr.bf16.mxu0 0
  %112 = vmatpush1.bf16.msra.mxu0 0
  %113 = vmatprep.subr.bf16.mxu0 0
  %114 = vmatpush1.bf16.msra.mxu0 0
  %115 = vmatprep.subr.bf16.mxu0 0
  %116 = vmatpush1.bf16.msra.mxu0 0
  %117 = vmatprep.subr.bf16.mxu0 0
  %118 = vmatpush1.bf16.msra.mxu0 0
  %119 = vmatprep.subr.bf16.mxu0 0
  %120 = vmatpush1.bf16.msra.mxu0 0
  %121 = vmatprep.subr.bf16.mxu0 0
  %122 = vmatpush1.bf16.msra.mxu0 0
  %123 = vmatprep.subr.bf16.mxu0 0
  %124 = vmatpush1.bf16.msra.mxu0 0
  %125 = vmatprep.subr.bf16.mxu0 0
  %126 = vmatpush1.bf16.msra.mxu0 0
  %127 = vmatprep.mubr.bf16.mxu0 0
  %128 = vmatmul.mubr.bf16.gmra.mrb[0].mxu0 %v45
  %v129 = vpop.f32.mrb[0].mxu0
  %v130 = vadd.f32 0.0, %v129
  %v131 = vpop.f32.mrb[0].mxu0
  %v132 = vpop.f32.mrb[0].mxu0
  %v133 = vadd.f32 0.0, %v132
  %v134 = vpop.f32.mrb[0].mxu0
  %135 = vdwg.mxu0
  %v136 = vadd.f32 %v37, %v130
  %v137 = vadd.f32 %v38, %v133
  %138 = vst [vmem:[%s3] sm:$0xff] %v136
  %139 = vst [vmem:[%s3 + $0x8] sm:$0xff] %v137
  // Predicated region
  $region18: #{model_forward.1} parent=0 // pred_check
    %p140 = pneg %p15
  $region19: #{model_forward.1} parent=0 // pred_check_branch
    %142 = sbr.rel (%p140) target = $region21
  $region20: #{model_forward.1} parent=0 // pred_region
    %v143 = vld [vmem:[%s3] sm:$0xff]
    %v144 = vld [vmem:[%s3 + $0x8] sm:$0xff]
    %v145 = vld [vmem:[%s2] sm:$0x1]
    %v147 = vlaneseq
    %v148 = vshrl.u32 %v147, 7
    %v149 = vsub.s32 0, %v148
    %v150 = vrot.slane %v145, %v149
    %v152 = vadd.f32 %v143, %v150
    %v153 = vadd.f32 %v144, %v150
    %v154 = vlaneseq
    %v155 = vand.u32 %v154, 127
    %vm156 = vcmp.lt.s32.totalorder %v155, 7
    %v157 = vsel %vm156, %v152, -1e+30
    %v158 = vsel %vm156, %v153, -1e+30
    %159 = vmax.xlane.f32.xlu0 %v157
    %v160 = vpop.xlane.xlu0 %159
    %161 = vmax.xlane.f32.xlu0 %v158
    %v162 = vpop.xlane.xlu0 %161
    %v163 = vsub.f32 %v157, %v160
    %v164 = vsub.f32 %v158, %v162
    %v165 = vmul.f32 %v163, 1.442695
    %v166 = vpow.pop %v165
    %v167 = vmul.f32 %v164, 1.442695
    %v168 = vpow.pop %v167
    %169 = vadd.xlane.f32.xlu0 %v166
    %v170 = vpop.xlane.xlu0 %169
    %171 = vadd.xlane.f32.xlu0 %v168
    %v172 = vpop.xlane.xlu0 %171
    %v173 = vlog2.pop %v170
    %v174 = vmul.f32 %v173, 0.6931472
    %v175 = vlog2.pop %v172
    %v176 = vmul.f32 %v175, 0.6931472
    %v177 = vsub.f32 %v163, %v174
    %v178 = vsub.f32 %v164, %v176
    %179 = vst [vmem:[%s3] sm:$0xff] %v177
    %180 = vst [vmem:[%s3 + $0x8] sm:$0xff] %v178
  $region21: #{model_forward.1} parent=0 // pred_fallthru
    _
  // Predicated region
  $region22: #{model_forward.1} parent=0 // pred_check
    _
  $region23: #{model_forward.1} parent=0 // pred_check_branch
    %182 = sbr.rel (0) target = $region25
  $region24: #{model_forward.1} parent=0 // pred_region
    _
  $region25: #{model_forward.1} parent=0 // pred_fallthru
    _
  // Predicated region
  $region26: #{model_forward.1} parent=0 // pred_check
    _
  $region27: #{model_forward.1} parent=0 // pred_check_branch
    %184 = sbr.rel (0) target = $region29
  $region28: #{model_forward.1} parent=0 // pred_region
    _
  $region29: #{model_forward.1} parent=0 // pred_fallthru
    _

</llo_original>
